<compile_context>
chip_gen: v7x
topology: tpu7x:2x2x1
jax: 0.10.0
libtpu: 0.0.40
codegen_flags: <defaults>
</compile_context>

<pallas_src>
import functools

import jax
import jax.numpy as jnp
from jax.experimental import pallas as pl
from jax.experimental.pallas import tpu as pltpu


def _round_up(n, m):
    return ((n + m - 1) // m) * m


def _fcnet_kernel(scale_ref, x_ref, *refs, num_layers, apply_relu):
    """Fused FCNet forward for one batch tile.

    scale_ref : SMEM (L,) f32 — per-layer weight-norm scale g/||v||_F
    x_ref     : VMEM (tile_b, P0) — zero-padded input activations
    refs      : v_0, b_0, v_1, b_1, ..., v_{L-1}, b_{L-1}, out_ref
                v_l is (Pin_l, Pout_l), b_l is (1, Pout_l), all lane-padded.

    The Python loop unrolls at trace time; the running activation `h` stays in
    vregs/VMEM for the whole network (no intermediate HBM traffic).
    """
    out_ref = refs[2 * num_layers]
    h = x_ref[...]
    for l in range(num_layers):
        v_ref = refs[2 * l]
        b_ref = refs[2 * l + 1]
        y = jnp.dot(h, v_ref[...], preferred_element_type=jnp.float32)
        y = y * scale_ref[l] + b_ref[...]  # scalar weight-norm scale + bias row
        if apply_relu:
            y = jnp.maximum(y, 0.0)
        h = y
    out_ref[...] = h.astype(out_ref.dtype)


def _choose_tile_b(batch_rows, p_in, p_out, resident_bytes,
                   vmem_budget_bytes=12 * 1024 * 1024, cap=512):
    """Largest multiple-of-8 batch tile s.t. double-buffered activation tiles
    plus the resident (un-tiled) weights/biases fit a conservative VMEM budget
    (safe under the default scoped VMEM limit on v5e/v6e/v7x)."""
    bytes_per_row = 4 * (p_in + p_out)  # f32 input tile row + output tile row
    avail = max(vmem_budget_bytes - resident_bytes, 2 * 8 * bytes_per_row)
    rows = avail // (2 * bytes_per_row)  # 2x for BlockSpec double buffering
    tb = min(batch_rows, cap, int(rows))
    return max(8, (tb // 8) * 8)


def init_fcnet_params(key, dims):
    """Deterministic FCNet parameters, pre-laid-out for the kernel.

    Mirrors nn.Linear init (uniform in [-1/sqrt(fan_in), 1/sqrt(fan_in)]) and
    weight_norm(dim=None) init (g = ||v||_F, so the effective weight at init
    equals v). Weights are stored pre-transposed as [in, out] and zero-padded
    so every feature dim is a multiple of 128 lanes (padding is exact).
    """
    layers = []
    for i in range(len(dims) - 1):
        in_dim, out_dim = dims[i], dims[i + 1]
        pin, pout = _round_up(in_dim, 128), _round_up(out_dim, 128)
        key, kw, kb = jax.random.split(key, 3)
        bound = 1.0 / jnp.sqrt(jnp.float32(in_dim))
        v = jax.random.uniform(kw, (in_dim, out_dim), jnp.float32, -bound, bound)
        b = jax.random.uniform(kb, (out_dim,), jnp.float32, -bound, bound)
        g = jnp.sqrt(jnp.sum(v * v))  # weight_norm(dim=None) init: g = ||v||_F
        v_pad = jnp.zeros((pin, pout), jnp.float32).at[:in_dim, :out_dim].set(v)
        b_pad = jnp.zeros((1, pout), jnp.float32).at[0, :out_dim].set(b)
        layers.append({"v_pad": v_pad, "b_pad": b_pad, "g": g})
    return {"layers": layers, "dims": tuple(dims)}


def fcnet_forward(params, x, act="ReLU", dropout=0.0, tile_b=None):
    """FCNet.forward: weight-normed Linear + activation after EVERY layer
    (including the last one), matching the reference module. dropout=0 is the
    identity (eval semantics), as in the module's default configuration.
    """
    del dropout  # dropout=0 in this configuration -> identity
    layers = params["layers"]
    dims = params["dims"]
    num_layers = len(layers)
    apply_relu = act != ""

    B, d_in = x.shape
    assert d_in == dims[0]
    p0 = layers[0]["v_pad"].shape[0]
    p_last = layers[-1]["v_pad"].shape[1]

    # weight_norm(dim=None): w_eff = g * v / ||v||_F. Only the scalar is
    # computed here; the Din x Dout scale happens implicitly in-kernel.
    scales = jnp.stack(
        [p["g"] * jax.lax.rsqrt(jnp.sum(p["v_pad"] * p["v_pad"])) for p in layers]
    ).astype(jnp.float32)

    resident_bytes = sum(
        p["v_pad"].size * 4 + p["b_pad"].size * 4 for p in layers
    )
    if tile_b is None:
        tile_b = _choose_tile_b(_round_up(B, 8), p0, p_last, resident_bytes)

    # Pad batch to a multiple of the tile and features to the lane-padded width.
    b_pad = _round_up(max(B, 8), tile_b)
    x_pad = jnp.zeros((b_pad, p0), jnp.float32).at[:B, :d_in].set(
        x.astype(jnp.float32)
    )

    grid = (b_pad // tile_b,)

    in_specs = [
        pl.BlockSpec(memory_space=pltpu.MemorySpace.SMEM),     # per-layer scales
        pl.BlockSpec((tile_b, p0), lambda i: (i, 0)),          # x batch tile
    ]
    operands = [scales, x_pad]
    for p in layers:
        pin, pout = p["v_pad"].shape
        in_specs.append(pl.BlockSpec((pin, pout), lambda i: (0, 0)))  # weight
        in_specs.append(pl.BlockSpec((1, pout), lambda i: (0, 0)))    # bias row
        operands.append(p["v_pad"])
        operands.append(p["b_pad"])

    kernel = functools.partial(
        _fcnet_kernel, num_layers=num_layers, apply_relu=apply_relu
    )

    out_pad = pl.pallas_call(
        kernel,
        out_shape=jax.ShapeDtypeStruct((b_pad, p_last), jnp.float32),
        grid_spec=pltpu.PrefetchScalarGridSpec(
            num_scalar_prefetch=0,
            grid=grid,
            in_specs=in_specs,
            out_specs=pl.BlockSpec((tile_b, p_last), lambda i: (i, 0)),
        ),
        compiler_params=pltpu.CompilerParams(
            dimension_semantics=("parallel",),
        ),
    )(*operands)

    return out_pad[:B, : dims[-1]]


if __name__ == "__main__":
    key = jax.random.PRNGKey(0)
    dims = [32, 64, 32]  # FCNet(dims=[32, 64, 32]): two weight-normed Linear+ReLU
    batch = 8

    kx, kp = jax.random.split(key)
    x = jax.random.normal(kx, (batch, dims[0]), jnp.float32)
    params = init_fcnet_params(kp, dims)

    out = fcnet_forward(params, x)
    out = jax.block_until_ready(out)

    # Pure-JAX reference of the same math (unpadded).
    ref = x
    for l, p in enumerate(params["layers"]):
        in_dim, out_dim = dims[l], dims[l + 1]
        v = p["v_pad"][:in_dim, :out_dim]
        b = p["b_pad"][0, :out_dim]
        w_eff = p["g"] * v / jnp.sqrt(jnp.sum(v * v))
        ref = jnp.maximum(ref @ w_eff + b, 0.0)

    assert out.shape == (batch, dims[-1])
    assert jnp.allclose(out, ref, atol=1e-5, rtol=1e-5)

    print("KERNEL_OK")
</pallas_src>

<mosaic_0001>
module attributes {stable_mosaic.version = 11 : i64} {
  func.func @_fcnet_kernel(%arg0: i32, %arg1: memref<2xf32, #tpu.memory_space<smem>>, %arg2: memref<8x128xf32, #tpu.memory_space<vmem>>, %arg3: memref<128x128xf32, #tpu.memory_space<vmem>>, %arg4: memref<1x128xf32, #tpu.memory_space<vmem>>, %arg5: memref<128x128xf32, #tpu.memory_space<vmem>>, %arg6: memref<1x128xf32, #tpu.memory_space<vmem>>, %arg7: memref<8x128xf32, #tpu.memory_space<vmem>>) attributes {dimension_semantics = [#tpu.dimension_semantics<parallel>], iteration_bounds = array<i64: 1>, scalar_prefetch = 0 : i64, scratch_operands = 0 : i64, tpu.core_type = #tpu.core_type<tc>, window_params = [{transform_indices = @transform_0, window_bounds = array<i64: 2>}, {transform_indices = @transform_1, window_bounds = array<i64: 8, 128>}, {pipeline_mode = #tpu.pipeline_mode<synchronous>, transform_indices = @transform_2, window_bounds = array<i64: 128, 128>}, {pipeline_mode = #tpu.pipeline_mode<synchronous>, transform_indices = @transform_3, window_bounds = array<i64: 1, 128>}, {pipeline_mode = #tpu.pipeline_mode<synchronous>, transform_indices = @transform_4, window_bounds = array<i64: 128, 128>}, {pipeline_mode = #tpu.pipeline_mode<synchronous>, transform_indices = @transform_5, window_bounds = array<i64: 1, 128>}, {transform_indices = @transform_6, window_bounds = array<i64: 8, 128>}]} {
    %c0 = arith.constant 0 : index
    %c0_0 = arith.constant 0 : index
    %0 = vector.load %arg2[%c0, %c0_0] : memref<8x128xf32, #tpu.memory_space<vmem>>, vector<8x128xf32>
    %c0_1 = arith.constant 0 : index
    %c0_2 = arith.constant 0 : index
    %1 = vector.load %arg3[%c0_1, %c0_2] : memref<128x128xf32, #tpu.memory_space<vmem>>, vector<128x128xf32>
    %cst = arith.constant dense<0.000000e+00> : vector<8x128xf32>
    %2 = tpu.matmul %0, %1, %cst {dimension_numbers = #tpu.dot_dimension_numbers<[1], [0], [0], [1], [0, 0, 1, 1], [], []>} : vector<8x128xf32>, vector<128x128xf32>, vector<8x128xf32> -> vector<8x128xf32>
    %c0_3 = arith.constant 0 : index
    %3 = memref.load %arg1[%c0_3] : memref<2xf32, #tpu.memory_space<smem>>
    %4 = vector.broadcast %3 : f32 to vector<8x128xf32>
    %5 = arith.mulf %2, %4 : vector<8x128xf32>
    %c0_4 = arith.constant 0 : index
    %c0_5 = arith.constant 0 : index
    %6 = vector.load %arg4[%c0_4, %c0_5] : memref<1x128xf32, #tpu.memory_space<vmem>>, vector<1x128xf32>
    %7 = vector.broadcast %6 : vector<1x128xf32> to vector<8x128xf32>
    %8 = arith.addf %5, %7 : vector<8x128xf32>
    %cst_6 = arith.constant 0.000000e+00 : f32
    %9 = vector.broadcast %cst_6 : f32 to vector<8x128xf32>
    %10 = arith.maximumf %8, %9 : vector<8x128xf32>
    %c0_7 = arith.constant 0 : index
    %c0_8 = arith.constant 0 : index
    %11 = vector.load %arg5[%c0_7, %c0_8] : memref<128x128xf32, #tpu.memory_space<vmem>>, vector<128x128xf32>
    %cst_9 = arith.constant dense<0.000000e+00> : vector<8x128xf32>
    %12 = tpu.matmul %10, %11, %cst_9 {dimension_numbers = #tpu.dot_dimension_numbers<[1], [0], [0], [1], [0, 0, 1, 1], [], []>} : vector<8x128xf32>, vector<128x128xf32>, vector<8x128xf32> -> vector<8x128xf32>
    %c1 = arith.constant 1 : index
    %13 = memref.load %arg1[%c1] : memref<2xf32, #tpu.memory_space<smem>>
    %14 = vector.broadcast %13 : f32 to vector<8x128xf32>
    %15 = arith.mulf %12, %14 : vector<8x128xf32>
    %c0_10 = arith.constant 0 : index
    %c0_11 = arith.constant 0 : index
    %16 = vector.load %arg6[%c0_10, %c0_11] : memref<1x128xf32, #tpu.memory_space<vmem>>, vector<1x128xf32>
    %17 = vector.broadcast %16 : vector<1x128xf32> to vector<8x128xf32>
    %18 = arith.addf %15, %17 : vector<8x128xf32>
    %cst_12 = arith.constant 0.000000e+00 : f32
    %19 = vector.broadcast %cst_12 : f32 to vector<8x128xf32>
    %20 = arith.maximumf %18, %19 : vector<8x128xf32>
    %c0_13 = arith.constant 0 : index
    %c0_14 = arith.constant 0 : index
    %21 = vector.load %arg7[%c0_13, %c0_14] : memref<8x128xf32, #tpu.memory_space<vmem>>, vector<8x128xf32>
    tpu.vector_store %arg7[%c0_13, %c0_14], %20 {strides = array<i32>} : memref<8x128xf32, #tpu.memory_space<vmem>>, vector<8x128xf32>,
    return
  }
  func.func @transform_0(%arg0: i32) -> i32 {
    %c0_i32 = arith.constant 0 : i32
    %c0_i32_0 = arith.constant 0 : i32
    return %c0_i32 : i32
  }
  func.func @transform_1(%arg0: i32) -> (i32, i32) {
    %c0_i32 = arith.constant 0 : i32
    %c0_i32_0 = arith.constant 0 : i32
    return %arg0, %c0_i32 : i32, i32
  }
  func.func @transform_2(%arg0: i32) -> (i32, i32) {
    %c0_i32 = arith.constant 0 : i32
    %c0_i32_0 = arith.constant 0 : i32
    %c0_i32_1 = arith.constant 0 : i32
    return %c0_i32, %c0_i32_0 : i32, i32
  }
  func.func @transform_3(%arg0: i32) -> (i32, i32) {
    %c0_i32 = arith.constant 0 : i32
    %c0_i32_0 = arith.constant 0 : i32
    %c0_i32_1 = arith.constant 0 : i32
    return %c0_i32, %c0_i32_0 : i32, i32
  }
  func.func @transform_4(%arg0: i32) -> (i32, i32) {
    %c0_i32 = arith.constant 0 : i32
    %c0_i32_0 = arith.constant 0 : i32
    %c0_i32_1 = arith.constant 0 : i32
    return %c0_i32, %c0_i32_0 : i32, i32
  }
  func.func @transform_5(%arg0: i32) -> (i32, i32) {
    %c0_i32 = arith.constant 0 : i32
    %c0_i32_0 = arith.constant 0 : i32
    %c0_i32_1 = arith.constant 0 : i32
    return %c0_i32, %c0_i32_0 : i32, i32
  }
  func.func @transform_6(%arg0: i32) -> (i32, i32) {
    %c0_i32 = arith.constant 0 : i32
    %c0_i32_0 = arith.constant 0 : i32
    return %arg0, %c0_i32 : i32, i32
  }
}

</mosaic_0001>

<llo_original>
// kernel: tpu_custom_call.1
$region0: #{tpu_custom_call.1}
  #allocation0 [shape = 'u32[]', space=smem, size = 0x4, offset = 0x4, fixed_abs, tag = 'smem constant byte address 0x4 - core index']
  #allocation1 [shape = 'u32[144,128]{1,0:T(1,128)}', space=vmem, size = 0x12000, scoped, tag = 'internal scratch']
  %s0 = inlined_call_operand.hbm [shape: f32[2], index: 0, kind: input, shape index: {}]
  %s1 = inlined_call_operand.hbm [shape: f32[8,128], index: 1, kind: input, shape index: {}]
  %s2 = inlined_call_operand.hbm [shape: f32[128,128], index: 2, kind: input, shape index: {}]
  %s3 = inlined_call_operand.vmem [shape: f32[1,128], index: 3, kind: input, shape index: {}]
  %s4 = inlined_call_operand.hbm [shape: f32[128,128], index: 4, kind: input, shape index: {}]
  %s5 = inlined_call_operand.vmem [shape: f32[1,128], index: 5, kind: input, shape index: {}]
  %s6 = inlined_call_operand.hbm [shape: f32[8,128], index: 6, kind: output, shape index: {}]
  %s7 = sld [smem:[#allocation0]]
  $region50: #{tpu_custom_call.1} parent=0
    _
  %s9 = ssub.s32 1, %s7
  %s10 = scalar_select 0, %s9, %s7
  $region1: #{tpu_custom_call.1} parent=0
    #allocation2 [shape = 'u8[512]{0}', space=smem, size = 0x200, scoped, tag = 'input window, operand 0, single buffered']
    #allocation3 [shape = 's32[1]{0}', space=sflag, size = 0x4, scoped, tag = 'scoped memory for tpu_custom_call.1']
    #allocation4 [shape = 's32[1]{0}', space=sflag, size = 0x4, scoped, tag = 'scoped memory for tpu_custom_call.1']
    #allocation5 [shape = 's32[1]{0}', space=sflag, size = 0x4, scoped, tag = 'scoped memory for tpu_custom_call.1']
    #allocation6 [shape = 'u8[4096]{0}', space=vmem, size = 0x1000, scoped, tag = 'input window, operand 1, single buffered']
    #allocation7 [shape = 'u8[65536]{0}', space=vmem, size = 0x10000, scoped, tag = 'input window, operand 2, single buffered']
    #allocation8 [shape = 's32[1]{0}', space=sflag, size = 0x4, scoped, tag = 'scoped memory for tpu_custom_call.1']
    #allocation9 [shape = 'u8[65536]{0}', space=vmem, size = 0x10000, scoped, tag = 'input window, operand 4, single buffered']
    #allocation10 [shape = 'u8[4096]{0}', space=vmem, size = 0x1000, scoped, tag = 'output window, operand 0, single buffered']
    %11 = vsyncpa [#allocation5], 0
    %12 = vsyncpa [#allocation3], 0
    %13 = vsyncpa [#allocation8], 0
    %14 = vsyncpa [#allocation4], 0
    // Predicated region
    $region2: #{tpu_custom_call.1} parent=1 // pred_check
      _
    $region3: #{tpu_custom_call.1} parent=1 // pred_check_branch
      %16 = sbr.rel (0) target = $region5
    $region4: #{tpu_custom_call.1} parent=1 // pred_region
      %s18 = ssub.s32 16, 16
      %19 = vsyncadd [#allocation5], %s18
      %22 = dma.hbm_to_smem %s0, 16, [#allocation2], [#allocation5]
    $region5: #{tpu_custom_call.1} parent=1 // pred_fallthru
      _
    // Predicated region
    $region6: #{tpu_custom_call.1} parent=1 // pred_check
      _
    $region7: #{tpu_custom_call.1} parent=1 // pred_check_branch
      %24 = sbr.rel (0) target = $region9
    $region8: #{tpu_custom_call.1} parent=1 // pred_region
      %s26 = ssub.s32 128, 128
      %27 = vsyncadd [#allocation3], %s26
      %s29 = sshll.u32 [#allocation6], 4
      %s30 = int_to_ptr.vmem [resolvable:$true] %s29
      %32 = dma.hbm_to_vmem [thread:$0]  %s1, 128, %s30, [#allocation3]
    $region9: #{tpu_custom_call.1} parent=1 // pred_fallthru
      _
    // Predicated region
    $region10: #{tpu_custom_call.1} parent=1 // pred_check
      _
    $region11: #{tpu_custom_call.1} parent=1 // pred_check_branch
      %34 = sbr.rel (0) target = $region13
    $region12: #{tpu_custom_call.1} parent=1 // pred_region
      %s36 = ssub.s32 2048, 2048
      %37 = vsyncadd [#allocation8], %s36
      %s38 = sshll.u32 [#allocation7], 4
      %s39 = int_to_ptr.vmem [resolvable:$true] %s38
      %44 = dma.hbm_to_vmem [thread:$0]  %s2, 2048, %s39, [#allocation8], 128, 128, 8
    $region13: #{tpu_custom_call.1} parent=1 // pred_fallthru
      _
    // Predicated region
    $region14: #{tpu_custom_call.1} parent=1 // pred_check
      _
    $region15: #{tpu_custom_call.1} parent=1 // pred_check_branch
      %46 = sbr.rel (0) target = $region17
    $region16: #{tpu_custom_call.1} parent=1 // pred_region
      _
    $region17: #{tpu_custom_call.1} parent=1 // pred_fallthru
      _
    // Predicated region
    $region18: #{tpu_custom_call.1} parent=1 // pred_check
      _
    $region19: #{tpu_custom_call.1} parent=1 // pred_check_branch
      %48 = sbr.rel (0) target = $region21
    $region20: #{tpu_custom_call.1} parent=1 // pred_region
      %s50 = ssub.s32 2048, 2048
      %51 = vsyncadd [#allocation8], %s50
      %s52 = sshll.u32 [#allocation9], 4
      %s53 = int_to_ptr.vmem [resolvable:$true] %s52
      %58 = dma.hbm_to_vmem [thread:$0]  %s4, 2048, %s53, [#allocation8], 128, 128, 8
    $region21: #{tpu_custom_call.1} parent=1 // pred_fallthru
      _
    // Predicated region
    $region22: #{tpu_custom_call.1} parent=1 // pred_check
      _
    $region23: #{tpu_custom_call.1} parent=1 // pred_check_branch
      %60 = sbr.rel (0) target = $region25
    $region24: #{tpu_custom_call.1} parent=1 // pred_region
      _
    $region25: #{tpu_custom_call.1} parent=1 // pred_fallthru
      _
    // Predicated region
    $region26: #{tpu_custom_call.1} parent=1 // pred_check
      _
    $region27: #{tpu_custom_call.1} parent=1 // pred_check_branch
      %62 = sbr.rel (0) target = $region29
    $region28: #{tpu_custom_call.1} parent=1 // pred_region
      %63 = dma.done [#allocation5], 16
    $region29: #{tpu_custom_call.1} parent=1 // pred_fallthru
      _
    // Predicated region
    $region30: #{tpu_custom_call.1} parent=1 // pred_check
      _
    $region31: #{tpu_custom_call.1} parent=1 // pred_check_branch
      %65 = sbr.rel (0) target = $region33
    $region32: #{tpu_custom_call.1} parent=1 // pred_region
      %66 = dma.done [#allocation3], 128
    $region33: #{tpu_custom_call.1} parent=1 // pred_fallthru
      _
    // Predicated region
    $region34: #{tpu_custom_call.1} parent=1 // pred_check
      _
    $region35: #{tpu_custom_call.1} parent=1 // pred_check_branch
      %68 = sbr.rel (0) target = $region37
    $region36: #{tpu_custom_call.1} parent=1 // pred_region
      %69 = dma.done [#allocation8], 2048
    $region37: #{tpu_custom_call.1} parent=1 // pred_fallthru
      _
    // Predicated region
    $region38: #{tpu_custom_call.1} parent=1 // pred_check
      _
    $region39: #{tpu_custom_call.1} parent=1 // pred_check_branch
      %71 = sbr.rel (0) target = $region41
    $region40: #{tpu_custom_call.1} parent=1 // pred_region
      %72 = dma.done [#allocation8], 2048
    $region41: #{tpu_custom_call.1} parent=1 // pred_fallthru
      _
    %73 = sfence
    %v74 = vld [vmem:[#allocation6] sm:$0xff]
    %v75 = vld [vmem:[#allocation7] sm:$0xff]
    %v76 = vld [vmem:[#allocation7 + $0x8] sm:$0xff]
    %v77 = vld [vmem:[#allocation7 + $0x10] sm:$0xff]
    %v78 = vld [vmem:[#allocation7 + $0x18] sm:$0xff]
    %v79 = vld [vmem:[#allocation7 + $0x20] sm:$0xff]
    %v80 = vld [vmem:[#allocation7 + $0x28] sm:$0xff]
    %v81 = vld [vmem:[#allocation7 + $0x30] sm:$0xff]
    %v82 = vld [vmem:[#allocation7 + $0x38] sm:$0xff]
    %v83 = vld [vmem:[#allocation7 + $0x40] sm:$0xff]
    %v84 = vld [vmem:[#allocation7 + $0x48] sm:$0xff]
    %v85 = vld [vmem:[#allocation7 + $0x50] sm:$0xff]
    %v86 = vld [vmem:[#allocation7 + $0x58] sm:$0xff]
    %v87 = vld [vmem:[#allocation7 + $0x60] sm:$0xff]
    %v88 = vld [vmem:[#allocation7 + $0x68] sm:$0xff]
    %v89 = vld [vmem:[#allocation7 + $0x70] sm:$0xff]
    %v90 = vld [vmem:[#allocation7 + $0x78] sm:$0xff]
    %91 = vmatprep.subr.mxu0 0.0
    %92 = vmatpush1.msra.mxu0 %v75
    %93 = vmatprep.subr.mxu0 0.0
    %94 = vmatpush1.msra.mxu0 %v76
    %95 = vmatprep.subr.mxu0 0.0
    %96 = vmatpush1.msra.mxu0 %v77
    %97 = vmatprep.subr.mxu0 0.0
    %98 = vmatpush1.msra.mxu0 %v78
    %99 = vmatprep.subr.mxu0 0.0
    %100 = vmatpush1.msra.mxu0 %v79
    %101 = vmatprep.subr.mxu0 0.0
    %102 = vmatpush1.msra.mxu0 %v80
    %103 = vmatprep.subr.mxu0 0.0
    %104 = vmatpush1.msra.mxu0 %v81
    %105 = vmatprep.subr.mxu0 0.0
    %106 = vmatpush1.msra.mxu0 %v82
    %107 = vmatprep.subr.mxu0 0.0
    %108 = vmatpush1.msra.mxu0 %v83
    %109 = vmatprep.subr.mxu0 0.0
    %110 = vmatpush1.msra.mxu0 %v84
    %111 = vmatprep.subr.mxu0 0.0
    %112 = vmatpush1.msra.mxu0 %v85
    %113 = vmatprep.subr.mxu0 0.0
    %114 = vmatpush1.msra.mxu0 %v86
    %115 = vmatprep.subr.mxu0 0.0
    %116 = vmatpush1.msra.mxu0 %v87
    %117 = vmatprep.subr.mxu0 0.0
    %118 = vmatpush1.msra.mxu0 %v88
    %119 = vmatprep.subr.mxu0 0.0
    %120 = vmatpush1.msra.mxu0 %v89
    %121 = vmatprep.subr.mxu0 0.0
    %122 = vmatpush1.msra.mxu0 %v90
    %123 = vmatprep.subr.mxu0 0.0
    %124 = vmatpush1.msra.mxu0 0.0
    %125 = vmatprep.subr.mxu0 0.0
    %126 = vmatpush1.msra.mxu0 0.0
    %127 = vmatprep.subr.mxu0 0.0
    %128 = vmatpush1.msra.mxu0 0.0
    %129 = vmatprep.subr.mxu0 0.0
    %130 = vmatpush1.msra.mxu0 0.0
    %131 = vmatprep.subr.mxu0 0.0
    %132 = vmatpush1.msra.mxu0 0.0
    %133 = vmatprep.subr.mxu0 0.0
    %134 = vmatpush1.msra.mxu0 0.0
    %135 = vmatprep.subr.mxu0 0.0
    %136 = vmatpush1.msra.mxu0 0.0
    %137 = vmatprep.subr.mxu0 0.0
    %138 = vmatpush1.msra.mxu0 0.0
    %139 = vmatprep.subr.mxu0 0.0
    %140 = vmatpush1.msra.mxu0 0.0
    %141 = vmatprep.subr.mxu0 0.0
    %142 = vmatpush1.msra.mxu0 0.0
    %143 = vmatprep.subr.mxu0 0.0
    %144 = vmatpush1.msra.mxu0 0.0
    %145 = vmatprep.subr.mxu0 0.0
    %146 = vmatpush1.msra.mxu0 0.0
    %147 = vmatprep.subr.mxu0 0.0
    %148 = vmatpush1.msra.mxu0 0.0
    %149 = vmatprep.subr.mxu0 0.0
    %150 = vmatpush1.msra.mxu0 0.0
    %151 = vmatprep.subr.mxu0 0.0
    %152 = vmatpush1.msra.mxu0 0.0
    %153 = vmatprep.subr.mxu0 0.0
    %154 = vmatpush1.msra.mxu0 0.0
    %155 = vmatprep.mubr.f32.mxu0 0.0
    %156 = vmatmul.mubr.f32.gmra.mrb[0].mxu0 %v74
    %v157 = vpop.f32.mrb[0].mxu0
    %v158 = vadd.f32 0.0, %v157
    %v159 = vpop.f32.mrb[0].mxu0
    %160 = vdwg.mxu0
    %s161 = sld [smem:[#allocation2]]
    %v162 = vstv %s161
    %v163 = vmul.f32 %v158, %v162
    %v164 = vld [vmem:[%s3] sm:$0x1]
    %v166 = vlaneseq
    %v167 = vshrl.u32 %v166, 7
    %v168 = vsub.s32 0, %v167
    %v169 = vrot.slane %v164, %v168
    %v171 = vadd.f32 %v163, %v169
    %v172 = vmax.f32 %v171, 0.0
    %v173 = vld [vmem:[#allocation9] sm:$0xff]
    %v174 = vld [vmem:[#allocation9 + $0x8] sm:$0xff]
    %v175 = vld [vmem:[#allocation9 + $0x10] sm:$0xff]
    %v176 = vld [vmem:[#allocation9 + $0x18] sm:$0xff]
    %v177 = vld [vmem:[#allocation9 + $0x20] sm:$0xff]
    %v178 = vld [vmem:[#allocation9 + $0x28] sm:$0xff]
    %v179 = vld [vmem:[#allocation9 + $0x30] sm:$0xff]
    %v180 = vld [vmem:[#allocation9 + $0x38] sm:$0xff]
    %v181 = vld [vmem:[#allocation9 + $0x40] sm:$0xff]
    %v182 = vld [vmem:[#allocation9 + $0x48] sm:$0xff]
    %v183 = vld [vmem:[#allocation9 + $0x50] sm:$0xff]
    %v184 = vld [vmem:[#allocation9 + $0x58] sm:$0xff]
    %v185 = vld [vmem:[#allocation9 + $0x60] sm:$0xff]
    %v186 = vld [vmem:[#allocation9 + $0x68] sm:$0xff]
    %v187 = vld [vmem:[#allocation9 + $0x70] sm:$0xff]
    %v188 = vld [vmem:[#allocation9 + $0x78] sm:$0xff]
    %189 = vmatprep.subr.mxu0 0.0
    %190 = vmatpush1.msra.mxu0 %v173
    %191 = vmatprep.subr.mxu0 0.0
    %192 = vmatpush1.msra.mxu0 %v174
    %193 = vmatprep.subr.mxu0 0.0
    %194 = vmatpush1.msra.mxu0 %v175
    %195 = vmatprep.subr.mxu0 0.0
    %196 = vmatpush1.msra.mxu0 %v176
    %197 = vmatprep.subr.mxu0 0.0
    %198 = vmatpush1.msra.mxu0 %v177
    %199 = vmatprep.subr.mxu0 0.0
    %200 = vmatpush1.msra.mxu0 %v178
    %201 = vmatprep.subr.mxu0 0.0
    %202 = vmatpush1.msra.mxu0 %v179
    %203 = vmatprep.subr.mxu0 0.0
    %204 = vmatpush1.msra.mxu0 %v180
    %205 = vmatprep.subr.mxu0 0.0
    %206 = vmatpush1.msra.mxu0 %v181
    %207 = vmatprep.subr.mxu0 0.0
    %208 = vmatpush1.msra.mxu0 %v182
    %209 = vmatprep.subr.mxu0 0.0
    %210 = vmatpush1.msra.mxu0 %v183
    %211 = vmatprep.subr.mxu0 0.0
    %212 = vmatpush1.msra.mxu0 %v184
    %213 = vmatprep.subr.mxu0 0.0
    %214 = vmatpush1.msra.mxu0 %v185
    %215 = vmatprep.subr.mxu0 0.0
    %216 = vmatpush1.msra.mxu0 %v186
    %217 = vmatprep.subr.mxu0 0.0
    %218 = vmatpush1.msra.mxu0 %v187
    %219 = vmatprep.subr.mxu0 0.0
    %220 = vmatpush1.msra.mxu0 %v188
    %221 = vmatprep.subr.mxu0 0.0
    %222 = vmatpush1.msra.mxu0 0.0
    %223 = vmatprep.subr.mxu0 0.0
    %224 = vmatpush1.msra.mxu0 0.0
    %225 = vmatprep.subr.mxu0 0.0
    %226 = vmatpush1.msra.mxu0 0.0
    %227 = vmatprep.subr.mxu0 0.0
    %228 = vmatpush1.msra.mxu0 0.0
    %229 = vmatprep.subr.mxu0 0.0
    %230 = vmatpush1.msra.mxu0 0.0
    %231 = vmatprep.subr.mxu0 0.0
    %232 = vmatpush1.msra.mxu0 0.0
    %233 = vmatprep.subr.mxu0 0.0
    %234 = vmatpush1.msra.mxu0 0.0
    %235 = vmatprep.subr.mxu0 0.0
    %236 = vmatpush1.msra.mxu0 0.0
    %237 = vmatprep.subr.mxu0 0.0
    %238 = vmatpush1.msra.mxu0 0.0
    %239 = vmatprep.subr.mxu0 0.0
    %240 = vmatpush1.msra.mxu0 0.0
    %241 = vmatprep.subr.mxu0 0.0
    %242 = vmatpush1.msra.mxu0 0.0
    %243 = vmatprep.subr.mxu0 0.0
    %244 = vmatpush1.msra.mxu0 0.0
    %245 = vmatprep.subr.mxu0 0.0
    %246 = vmatpush1.msra.mxu0 0.0
    %247 = vmatprep.subr.mxu0 0.0
    %248 = vmatpush1.msra.mxu0 0.0
    %249 = vmatprep.subr.mxu0 0.0
    %250 = vmatpush1.msra.mxu0 0.0
    %251 = vmatprep.subr.mxu0 0.0
    %252 = vmatpush1.msra.mxu0 0.0
    %253 = vmatprep.mubr.f32.mxu0 0.0
    %254 = vmatmul.mubr.f32.gmra.mrb[0].mxu0 %v172
    %v255 = vpop.f32.mrb[0].mxu0
    %v256 = vadd.f32 0.0, %v255
    %v257 = vpop.f32.mrb[0].mxu0
    %258 = vdwg.mxu0
    %s259 = sld [smem:[#allocation2 + $0x1]]
    %v260 = vstv %s259
    %v261 = vmul.f32 %v256, %v260
    %v262 = vld [vmem:[%s5] sm:$0x1]
    %v264 = vlaneseq
    %v265 = vshrl.u32 %v264, 7
    %v266 = vsub.s32 0, %v265
    %v267 = vrot.slane %v262, %v266
    %v269 = vadd.f32 %v261, %v267
    %v270 = vmax.f32 %v269, 0.0
    %271 = vst [vmem:[#allocation10] sm:$0xff] %v270
    // Predicated region
    $region42: #{tpu_custom_call.1} parent=1 // pred_check
      _
    $region43: #{tpu_custom_call.1} parent=1 // pred_check_branch
      %273 = sbr.rel (0) target = $region45
    $region44: #{tpu_custom_call.1} parent=1 // pred_region
      %s275 = ssub.s32 128, 128
      %276 = vsyncadd [#allocation4], %s275
      %s278 = sshll.u32 [#allocation10], 4
      %s279 = int_to_ptr.vmem [resolvable:$true] %s278
      %281 = dma.vmem_to_hbm [thread:$0]  %s279, 128, %s6, [#allocation4]
    $region45: #{tpu_custom_call.1} parent=1 // pred_fallthru
      _
    // Predicated region
    $region46: #{tpu_custom_call.1} parent=1 // pred_check
      _
    $region47: #{tpu_custom_call.1} parent=1 // pred_check_branch
      %283 = sbr.rel (0) target = $region49
    $region48: #{tpu_custom_call.1} parent=1 // pred_region
      %284 = dma.done [#allocation4], 128
    $region49: #{tpu_custom_call.1} parent=1 // pred_fallthru
      _
    %285 = vsyncpa [#allocation3], 1
    %286 = vsyncpa [#allocation8], 1
    %287 = vsyncpa [#allocation4], 1
    %288 = vsyncpa [#allocation5], 1

</llo_original>
